<compile_context>
chip_gen: v7x
topology: tpu7x:2x2x1
jax: 0.10.0
libtpu: 0.0.40
codegen_flags: <defaults>
</compile_context>

<pallas_src>
import functools

import jax
import jax.numpy as jnp
from jax.experimental import pallas as pl
from jax.experimental.pallas import tpu as pltpu


# -----------------------------------------------------------------------------
# Kernel (feature-major: batch along lanes)
# -----------------------------------------------------------------------------
def actor_kernel(x_ref, w1_ref, b1_ref, w2_ref, b2_ref, w3_ref, b3_ref, o_ref,
                 *, max_action, mid_dtype):
    cdt = w1_ref.dtype                        # matmul input dtype (bf16 default)

    x = x_ref[...].astype(cdt)                # [S, TB]

    # Layer 1: [64, S] @ [S, TB] -> [64, TB]; bias + ReLU in mid_dtype.
    h1 = jnp.dot(w1_ref[...], x, preferred_element_type=mid_dtype)
    h1 = jnp.maximum(h1 + b1_ref[...], 0).astype(cdt)

    # Layer 2: [32, 64] @ [64, TB] -> [32, TB]
    h2 = jnp.dot(w2_ref[...], h1, preferred_element_type=mid_dtype)
    h2 = jnp.maximum(h2 + b2_ref[...], 0).astype(cdt)

    # Layer 3 + epilogue in f32: [A, 32] @ [32, TB] -> [A, TB]; sigmoid on the EUP.
    z = jnp.dot(w3_ref[...], h2, preferred_element_type=jnp.float32) + b3_ref[...]
    o_ref[...] = (max_action * jax.nn.sigmoid(z)).astype(o_ref.dtype)


# -----------------------------------------------------------------------------
# Params (matches Actor.__init__: weights ~ N(0, 0.1), biases = 0.1)
# PyTorch-native [out, in] weight layout; biases as (out, 1) columns.
# -----------------------------------------------------------------------------
def init_actor_params(key, state_dim, action_dim):
    k1, k2, k3 = jax.random.split(key, 3)
    return {
        "w1": 0.1 * jax.random.normal(k1, (64, state_dim), jnp.float32),
        "b1": jnp.full((64, 1), 0.1, jnp.float32),
        "w2": 0.1 * jax.random.normal(k2, (32, 64), jnp.float32),
        "b2": jnp.full((32, 1), 0.1, jnp.float32),
        "w3": 0.1 * jax.random.normal(k3, (action_dim, 32), jnp.float32),
        "b3": jnp.full((action_dim, 1), 0.1, jnp.float32),
    }


def _round_up(x, m):
    return ((x + m - 1) // m) * m


# -----------------------------------------------------------------------------
# Wrapper
# -----------------------------------------------------------------------------
def actor_forward(state, params, max_action, *,
                  block_cols=4096, compute_dtype=jnp.bfloat16, mid_dtype=None):
    if mid_dtype is None:
        mid_dtype = compute_dtype             # use jnp.float32 here on v5e (no bf16 VALU)

    B, state_dim = state.shape
    action_dim = params["w3"].shape[0]

    # Batch tile along lanes: multiple of 128; large (amortize per-step overhead), but
    # capped so batches >= 256 rows always produce >= 2 grid steps (both v7x TCs busy).
    b128 = _round_up(max(B, 1), 128)
    tb = min(block_cols, b128)
    if b128 >= 256:
        tb = min(tb, _round_up(b128 // 2, 128))
    tb = max(128, _round_up(tb, 128))
    b_pad = _round_up(B, tb)

    # Feature-major input: [S, B_pad]; padded zero columns are sliced off below.
    x = state.astype(jnp.float32).T
    if b_pad != B:
        x = jnp.pad(x, ((0, 0), (0, b_pad - B)))

    w1 = params["w1"].astype(compute_dtype)
    w2 = params["w2"].astype(compute_dtype)
    w3 = params["w3"].astype(compute_dtype)
    b1 = params["b1"].astype(mid_dtype)
    b2 = params["b2"].astype(mid_dtype)
    b3 = params["b3"].astype(jnp.float32)

    grid = (b_pad // tb,)

    flops = 2 * b_pad * (state_dim * 64 + 64 * 32 + 32 * action_dim)
    weight_bytes = sum(int(a.size) * a.dtype.itemsize
                       for a in (w1, b1, w2, b2, w3, b3))
    cost = pl.CostEstimate(
        flops=flops,
        transcendentals=b_pad * action_dim,
        bytes_accessed=b_pad * state_dim * 4 + b_pad * action_dim * 4 + weight_bytes,
    )

    kernel = functools.partial(
        actor_kernel,
        max_action=float(max_action),          # static hyperparameter, baked into kernel
        mid_dtype=mid_dtype,
    )

    out = pl.pallas_call(
        kernel,
        out_shape=jax.ShapeDtypeStruct((action_dim, b_pad), jnp.float32),
        grid=grid,
        in_specs=[
            # streamed per batch tile (batch on the lane axis)
            pl.BlockSpec((state_dim, tb), lambda i: (0, i)),
            # weights/biases: same block every step -> resident in VMEM
            pl.BlockSpec((64, state_dim), lambda i: (0, 0)),
            pl.BlockSpec((64, 1), lambda i: (0, 0)),
            pl.BlockSpec((32, 64), lambda i: (0, 0)),
            pl.BlockSpec((32, 1), lambda i: (0, 0)),
            pl.BlockSpec((action_dim, 32), lambda i: (0, 0)),
            pl.BlockSpec((action_dim, 1), lambda i: (0, 0)),
        ],
        out_specs=pl.BlockSpec((action_dim, tb), lambda i: (0, i)),
        compiler_params=pltpu.CompilerParams(
            dimension_semantics=("parallel",),  # batch tiles shard across TCs on v7x
        ),
        cost_estimate=cost,
    )(x, w1, b1, w2, b2, w3, b3)

    # Back to batch-major [B, action_dim]; wrapper-side layout plumbing only.
    return out[:, :B].T


# -----------------------------------------------------------------------------
# Pure-JAX reference (matches the PyTorch forward, f32 end to end)
# -----------------------------------------------------------------------------
def actor_forward_ref(state, params, max_action):
    h1 = jnp.maximum(state @ params["w1"].T + params["b1"][:, 0], 0.0)
    h2 = jnp.maximum(h1 @ params["w2"].T + params["b2"][:, 0], 0.0)
    z = h2 @ params["w3"].T + params["b3"][:, 0]
    return jnp.asarray(max_action, jnp.float32) * jax.nn.sigmoid(z)


if __name__ == "__main__":
    key = jax.random.PRNGKey(0)
    kp, kx1, kx2 = jax.random.split(key, 3)

    state_dim = 8
    action_dim = 4
    max_action = 2.0
    params = init_actor_params(kp, state_dim, action_dim)

    # --- Small batch (module-consistent test shape) -------------------------
    batch = 2
    state = jax.random.normal(kx1, (batch, state_dim), jnp.float32)
    ref = actor_forward_ref(state, params, max_action)

    # f32 compute path: tight-ish tolerance (MXU f32 matmul precision dependent).
    out_f32 = jax.block_until_ready(
        actor_forward(state, params, max_action,
                      compute_dtype=jnp.float32, mid_dtype=jnp.float32))
    assert out_f32.shape == (batch, action_dim)
    assert jnp.allclose(out_f32, ref, atol=2e-3, rtol=2e-3), "f32 mismatch vs reference"

    # Default bf16-matmul / bf16-intermediate path: looser tolerance.
    out_bf16 = jax.block_until_ready(actor_forward(state, params, max_action))
    assert out_bf16.shape == (batch, action_dim)
    assert jnp.allclose(out_bf16, ref, atol=5e-2, rtol=5e-2), "bf16 mismatch vs reference"

    # --- Larger, non-aligned batch: exercises padding + multi-step batch grid ---
    big_batch = 1037
    state_big = jax.random.normal(kx2, (big_batch, state_dim), jnp.float32)
    ref_big = actor_forward_ref(state_big, params, max_action)
    out_big = jax.block_until_ready(actor_forward(state_big, params, max_action))
    assert out_big.shape == (big_batch, action_dim)
    assert jnp.allclose(out_big, ref_big, atol=5e-2, rtol=5e-2), "grid mismatch vs reference"

    print("KERNEL_OK")
</pallas_src>

<mosaic_0001>
module attributes {stable_mosaic.version = 11 : i64} {
  func.func @actor_kernel(%arg0: i32, %arg1: memref<8x128xf32, #tpu.memory_space<vmem>>, %arg2: memref<64x8xf32, #tpu.memory_space<vmem>>, %arg3: memref<64x1xf32, #tpu.memory_space<vmem>>, %arg4: memref<32x64xf32, #tpu.memory_space<vmem>>, %arg5: memref<32x1xf32, #tpu.memory_space<vmem>>, %arg6: memref<4x32xf32, #tpu.memory_space<vmem>>, %arg7: memref<4x1xf32, #tpu.memory_space<vmem>>, %arg8: memref<4x128xf32, #tpu.memory_space<vmem>>) attributes {dimension_semantics = [#tpu.dimension_semantics<parallel>], iteration_bounds = array<i64: 1>, scalar_prefetch = 0 : i64, scratch_operands = 0 : i64, tpu.core_type = #tpu.core_type<tc>, window_params = [{transform_indices = @transform_0, window_bounds = array<i64: 8, 128>}, {pipeline_mode = #tpu.pipeline_mode<synchronous>, transform_indices = @transform_1, window_bounds = array<i64: 64, 8>}, {pipeline_mode = #tpu.pipeline_mode<synchronous>, transform_indices = @transform_2, window_bounds = array<i64: 64, 1>}, {pipeline_mode = #tpu.pipeline_mode<synchronous>, transform_indices = @transform_3, window_bounds = array<i64: 32, 64>}, {pipeline_mode = #tpu.pipeline_mode<synchronous>, transform_indices = @transform_4, window_bounds = array<i64: 32, 1>}, {pipeline_mode = #tpu.pipeline_mode<synchronous>, transform_indices = @transform_5, window_bounds = array<i64: 4, 32>}, {pipeline_mode = #tpu.pipeline_mode<synchronous>, transform_indices = @transform_6, window_bounds = array<i64: 4, 1>}, {transform_indices = @transform_7, window_bounds = array<i64: 4, 128>}]} {
    %c0 = arith.constant 0 : index
    %c0_0 = arith.constant 0 : index
    %0 = vector.load %arg1[%c0, %c0_0] : memref<8x128xf32, #tpu.memory_space<vmem>>, vector<8x128xf32>
    %c0_1 = arith.constant 0 : index
    %c0_2 = arith.constant 0 : index
    %1 = vector.load %arg2[%c0_1, %c0_2] : memref<64x8xf32, #tpu.memory_space<vmem>>, vector<64x8xf32>
    %cst = arith.constant dense<0.000000e+00> : vector<64x128xf32>
    %2 = tpu.matmul %1, %0, %cst {dimension_numbers = #tpu.dot_dimension_numbers<[1], [0], [0], [1], [0, 0, 1, 1], [], []>} : vector<64x8xf32>, vector<8x128xf32>, vector<64x128xf32> -> vector<64x128xf32>
    %c0_3 = arith.constant 0 : index
    %c0_4 = arith.constant 0 : index
    %3 = vector.load %arg3[%c0_3, %c0_4] : memref<64x1xf32, #tpu.memory_space<vmem>>, vector<64x1xf32>
    %4 = vector.broadcast %3 : vector<64x1xf32> to vector<64x128xf32>
    %5 = arith.addf %2, %4 : vector<64x128xf32>
    %cst_5 = arith.constant 0.000000e+00 : f32
    %6 = vector.broadcast %cst_5 : f32 to vector<64x128xf32>
    %7 = arith.maximumf %5, %6 : vector<64x128xf32>
    %c0_6 = arith.constant 0 : index
    %c0_7 = arith.constant 0 : index
    %8 = vector.load %arg4[%c0_6, %c0_7] : memref<32x64xf32, #tpu.memory_space<vmem>>, vector<32x64xf32>
    %cst_8 = arith.constant dense<0.000000e+00> : vector<32x128xf32>
    %9 = tpu.matmul %8, %7, %cst_8 {dimension_numbers = #tpu.dot_dimension_numbers<[1], [0], [0], [1], [0, 0, 1, 1], [], []>} : vector<32x64xf32>, vector<64x128xf32>, vector<32x128xf32> -> vector<32x128xf32>
    %c0_9 = arith.constant 0 : index
    %c0_10 = arith.constant 0 : index
    %10 = vector.load %arg5[%c0_9, %c0_10] : memref<32x1xf32, #tpu.memory_space<vmem>>, vector<32x1xf32>
    %11 = vector.broadcast %10 : vector<32x1xf32> to vector<32x128xf32>
    %12 = arith.addf %9, %11 : vector<32x128xf32>
    %cst_11 = arith.constant 0.000000e+00 : f32
    %13 = vector.broadcast %cst_11 : f32 to vector<32x128xf32>
    %14 = arith.maximumf %12, %13 : vector<32x128xf32>
    %c0_12 = arith.constant 0 : index
    %c0_13 = arith.constant 0 : index
    %15 = vector.load %arg6[%c0_12, %c0_13] : memref<4x32xf32, #tpu.memory_space<vmem>>, vector<4x32xf32>
    %cst_14 = arith.constant dense<0.000000e+00> : vector<4x128xf32>
    %16 = tpu.matmul %15, %14, %cst_14 {dimension_numbers = #tpu.dot_dimension_numbers<[1], [0], [0], [1], [0, 0, 1, 1], [], []>} : vector<4x32xf32>, vector<32x128xf32>, vector<4x128xf32> -> vector<4x128xf32>
    %c0_15 = arith.constant 0 : index
    %c0_16 = arith.constant 0 : index
    %17 = vector.load %arg7[%c0_15, %c0_16] : memref<4x1xf32, #tpu.memory_space<vmem>>, vector<4x1xf32>
    %18 = vector.broadcast %17 : vector<4x1xf32> to vector<4x128xf32>
    %19 = arith.addf %16, %18 : vector<4x128xf32>
    %20 = arith.negf %19 : vector<4x128xf32>
    %21 = math.exp %20 : vector<4x128xf32>
    %cst_17 = arith.constant 1.000000e+00 : f32
    %22 = vector.broadcast %cst_17 : f32 to vector<4x128xf32>
    %23 = arith.addf %22, %21 : vector<4x128xf32>
    %24 = arith.divf %22, %23 : vector<4x128xf32>
    %cst_18 = arith.constant 2.000000e+00 : f32
    %25 = vector.broadcast %cst_18 : f32 to vector<4x128xf32>
    %26 = arith.mulf %25, %24 : vector<4x128xf32>
    %c0_19 = arith.constant 0 : index
    %c0_20 = arith.constant 0 : index
    %27 = vector.load %arg8[%c0_19, %c0_20] : memref<4x128xf32, #tpu.memory_space<vmem>>, vector<4x128xf32>
    tpu.vector_store %arg8[%c0_19, %c0_20], %26 {strides = array<i32>} : memref<4x128xf32, #tpu.memory_space<vmem>>, vector<4x128xf32>,
    return
  }
  func.func @transform_0(%arg0: i32) -> (i32, i32) {
    %c0_i32 = arith.constant 0 : i32
    %c0_i32_0 = arith.constant 0 : i32
    return %c0_i32, %arg0 : i32, i32
  }
  func.func @transform_1(%arg0: i32) -> (i32, i32) {
    %c0_i32 = arith.constant 0 : i32
    %c0_i32_0 = arith.constant 0 : i32
    %c0_i32_1 = arith.constant 0 : i32
    return %c0_i32, %c0_i32_0 : i32, i32
  }
  func.func @transform_2(%arg0: i32) -> (i32, i32) {
    %c0_i32 = arith.constant 0 : i32
    %c0_i32_0 = arith.constant 0 : i32
    %c0_i32_1 = arith.constant 0 : i32
    return %c0_i32, %c0_i32_0 : i32, i32
  }
  func.func @transform_3(%arg0: i32) -> (i32, i32) {
    %c0_i32 = arith.constant 0 : i32
    %c0_i32_0 = arith.constant 0 : i32
    %c0_i32_1 = arith.constant 0 : i32
    return %c0_i32, %c0_i32_0 : i32, i32
  }
  func.func @transform_4(%arg0: i32) -> (i32, i32) {
    %c0_i32 = arith.constant 0 : i32
    %c0_i32_0 = arith.constant 0 : i32
    %c0_i32_1 = arith.constant 0 : i32
    return %c0_i32, %c0_i32_0 : i32, i32
  }
  func.func @transform_5(%arg0: i32) -> (i32, i32) {
    %c0_i32 = arith.constant 0 : i32
    %c0_i32_0 = arith.constant 0 : i32
    %c0_i32_1 = arith.constant 0 : i32
    return %c0_i32, %c0_i32_0 : i32, i32
  }
  func.func @transform_6(%arg0: i32) -> (i32, i32) {
    %c0_i32 = arith.constant 0 : i32
    %c0_i32_0 = arith.constant 0 : i32
    %c0_i32_1 = arith.constant 0 : i32
    return %c0_i32, %c0_i32_0 : i32, i32
  }
  func.func @transform_7(%arg0: i32) -> (i32, i32) {
    %c0_i32 = arith.constant 0 : i32
    %c0_i32_0 = arith.constant 0 : i32
    return %c0_i32, %arg0 : i32, i32
  }
}

</mosaic_0001>

<llo_original>
// kernel: tpu_custom_call.1
$region0: #{tpu_custom_call.1}
  #allocation0 [shape = 'u32[]', space=smem, size = 0x4, offset = 0x4, fixed_abs, tag = 'smem constant byte address 0x4 - core index']
  #allocation1 [shape = 'u32[144,128]{1,0:T(1,128)}', space=vmem, size = 0x12000, scoped, tag = 'internal scratch']
  %s0 = inlined_call_operand.vmem [shape: f32[8,128], index: 0, kind: input, shape index: {}]
  %s1 = inlined_call_operand.vmem [shape: f32[64,8], index: 1, kind: input, shape index: {}]
  %s2 = inlined_call_operand.vmem [shape: f32[64,1], index: 2, kind: input, shape index: {}]
  %s3 = inlined_call_operand.vmem [shape: f32[32,64], index: 3, kind: input, shape index: {}]
  %s4 = inlined_call_operand.vmem [shape: f32[32,1], index: 4, kind: input, shape index: {}]
  %s5 = inlined_call_operand.vmem [shape: f32[4,32], index: 5, kind: input, shape index: {}]
  %s6 = inlined_call_operand.vmem [shape: f32[4,1], index: 6, kind: input, shape index: {}]
  %s7 = inlined_call_operand.hbm [shape: f32[4,128], index: 7, kind: output, shape index: {}]
  %s8 = sld [smem:[#allocation0]]
  $region38: #{tpu_custom_call.1} parent=0
    _
  %s10 = ssub.s32 1, %s8
  %s11 = scalar_select 0, %s10, %s8
  $region1: #{tpu_custom_call.1} parent=0
    #allocation2 [shape = 'u8[2048]{0}', space=vmem, size = 0x800, scoped, tag = 'output window, operand 0, single buffered']
    #allocation3 [shape = 's32[1]{0}', space=sflag, size = 0x4, scoped, tag = 'scoped memory for tpu_custom_call.1']
    %12 = vsyncpa [#allocation3], 0
    // Predicated region
    $region2: #{tpu_custom_call.1} parent=1 // pred_check
      _
    $region3: #{tpu_custom_call.1} parent=1 // pred_check_branch
      %14 = sbr.rel (0) target = $region5
    $region4: #{tpu_custom_call.1} parent=1 // pred_region
      _
    $region5: #{tpu_custom_call.1} parent=1 // pred_fallthru
      _
    // Predicated region
    $region6: #{tpu_custom_call.1} parent=1 // pred_check
      _
    $region7: #{tpu_custom_call.1} parent=1 // pred_check_branch
      %16 = sbr.rel (0) target = $region9
    $region8: #{tpu_custom_call.1} parent=1 // pred_region
      _
    $region9: #{tpu_custom_call.1} parent=1 // pred_fallthru
      _
    // Predicated region
    $region10: #{tpu_custom_call.1} parent=1 // pred_check
      _
    $region11: #{tpu_custom_call.1} parent=1 // pred_check_branch
      %18 = sbr.rel (0) target = $region13
    $region12: #{tpu_custom_call.1} parent=1 // pred_region
      _
    $region13: #{tpu_custom_call.1} parent=1 // pred_fallthru
      _
    // Predicated region
    $region14: #{tpu_custom_call.1} parent=1 // pred_check
      _
    $region15: #{tpu_custom_call.1} parent=1 // pred_check_branch
      %20 = sbr.rel (0) target = $region17
    $region16: #{tpu_custom_call.1} parent=1 // pred_region
      _
    $region17: #{tpu_custom_call.1} parent=1 // pred_fallthru
      _
    // Predicated region
    $region18: #{tpu_custom_call.1} parent=1 // pred_check
      _
    $region19: #{tpu_custom_call.1} parent=1 // pred_check_branch
      %22 = sbr.rel (0) target = $region21
    $region20: #{tpu_custom_call.1} parent=1 // pred_region
      _
    $region21: #{tpu_custom_call.1} parent=1 // pred_fallthru
      _
    // Predicated region
    $region22: #{tpu_custom_call.1} parent=1 // pred_check
      _
    $region23: #{tpu_custom_call.1} parent=1 // pred_check_branch
      %24 = sbr.rel (0) target = $region25
    $region24: #{tpu_custom_call.1} parent=1 // pred_region
      _
    $region25: #{tpu_custom_call.1} parent=1 // pred_fallthru
      _
    // Predicated region
    $region26: #{tpu_custom_call.1} parent=1 // pred_check
      _
    $region27: #{tpu_custom_call.1} parent=1 // pred_check_branch
      %26 = sbr.rel (0) target = $region29
    $region28: #{tpu_custom_call.1} parent=1 // pred_region
      _
    $region29: #{tpu_custom_call.1} parent=1 // pred_fallthru
      _
    %v27 = vld [vmem:[%s0] sm:$0xff]
    %v28 = vld [vmem:[%s1] sm:$0xff]
    %v29 = vld [vmem:[%s1 + $0x8] sm:$0xff]
    %v30 = vld [vmem:[%s1 + $0x10] sm:$0xff]
    %v31 = vld [vmem:[%s1 + $0x18] sm:$0xff]
    %v32 = vld [vmem:[%s1 + $0x20] sm:$0xff]
    %v33 = vld [vmem:[%s1 + $0x28] sm:$0xff]
    %v34 = vld [vmem:[%s1 + $0x30] sm:$0xff]
    %v35 = vld [vmem:[%s1 + $0x38] sm:$0xff]
    %v36 = vld [vmem:[%s2] sm:$0xff]
    %v37 = vld [vmem:[%s2 + $0x8] sm:$0xff]
    %v38 = vld [vmem:[%s2 + $0x10] sm:$0xff]
    %v39 = vld [vmem:[%s2 + $0x18] sm:$0xff]
    %v40 = vld [vmem:[%s2 + $0x20] sm:$0xff]
    %v41 = vld [vmem:[%s2 + $0x28] sm:$0xff]
    %v42 = vld [vmem:[%s2 + $0x30] sm:$0xff]
    %v43 = vld [vmem:[%s2 + $0x38] sm:$0xff]
    %45 = vset.pattern.permute.xlu0 0
    %46 = vperm.xlu0 %45, %v36
    %v47 = vpop.permute.xlu0 %46
    %50 = vset.pattern.permute.xlu0 0
    %51 = vperm.xlu0 %50, %v37
    %v52 = vpop.permute.xlu0 %51
    %55 = vset.pattern.permute.xlu0 0
    %56 = vperm.xlu0 %55, %v38
    %v57 = vpop.permute.xlu0 %56
    %60 = vset.pattern.permute.xlu0 0
    %61 = vperm.xlu0 %60, %v39
    %v62 = vpop.permute.xlu0 %61
    %65 = vset.pattern.permute.xlu0 0
    %66 = vperm.xlu0 %65, %v40
    %v67 = vpop.permute.xlu0 %66
    %70 = vset.pattern.permute.xlu0 0
    %71 = vperm.xlu0 %70, %v41
    %v72 = vpop.permute.xlu0 %71
    %75 = vset.pattern.permute.xlu0 0
    %76 = vperm.xlu0 %75, %v42
    %v77 = vpop.permute.xlu0 %76
    %80 = vset.pattern.permute.xlu0 0
    %81 = vperm.xlu0 %80, %v43
    %v82 = vpop.permute.xlu0 %81
    %vm84 = vcmask 64512
    %v86 = vsel %vm84, %v28, 0
    %v89 = vsel %vm84, %v29, 0
    %v92 = vsel %vm84, %v30, 0
    %v95 = vsel %vm84, %v31, 0
    %v98 = vsel %vm84, %v32, 0
    %v101 = vsel %vm84, %v33, 0
    %v104 = vsel %vm84, %v34, 0
    %v107 = vsel %vm84, %v35, 0
    %109 = vmatprep.subr.mxu0 0.0
    %110 = vmatpush1.msra.mxu0 %v27
    %111 = vmatprep.subr.mxu0 0.0
    %112 = vmatpush1.msra.mxu0 0.0
    %113 = vmatprep.subr.mxu0 0.0
    %114 = vmatpush1.msra.mxu0 0.0
    %115 = vmatprep.subr.mxu0 0.0
    %116 = vmatpush1.msra.mxu0 0.0
    %117 = vmatprep.subr.mxu0 0.0
    %118 = vmatpush1.msra.mxu0 0.0
    %119 = vmatprep.subr.mxu0 0.0
    %120 = vmatpush1.msra.mxu0 0.0
    %121 = vmatprep.subr.mxu0 0.0
    %122 = vmatpush1.msra.mxu0 0.0
    %123 = vmatprep.subr.mxu0 0.0
    %124 = vmatpush1.msra.mxu0 0.0
    %125 = vmatprep.subr.mxu0 0.0
    %126 = vmatpush1.msra.mxu0 0.0
    %127 = vmatprep.subr.mxu0 0.0
    %128 = vmatpush1.msra.mxu0 0.0
    %129 = vmatprep.subr.mxu0 0.0
    %130 = vmatpush1.msra.mxu0 0.0
    %131 = vmatprep.subr.mxu0 0.0
    %132 = vmatpush1.msra.mxu0 0.0
    %133 = vmatprep.subr.mxu0 0.0
    %134 = vmatpush1.msra.mxu0 0.0
    %135 = vmatprep.subr.mxu0 0.0
    %136 = vmatpush1.msra.mxu0 0.0
    %137 = vmatprep.subr.mxu0 0.0
    %138 = vmatpush1.msra.mxu0 0.0
    %139 = vmatprep.subr.mxu0 0.0
    %140 = vmatpush1.msra.mxu0 0.0
    %141 = vmatprep.subr.mxu0 0.0
    %142 = vmatpush1.msra.mxu0 0.0
    %143 = vmatprep.subr.mxu0 0.0
    %144 = vmatpush1.msra.mxu0 0.0
    %145 = vmatprep.subr.mxu0 0.0
    %146 = vmatpush1.msra.mxu0 0.0
    %147 = vmatprep.subr.mxu0 0.0
    %148 = vmatpush1.msra.mxu0 0.0
    %149 = vmatprep.subr.mxu0 0.0
    %150 = vmatpush1.msra.mxu0 0.0
    %151 = vmatprep.subr.mxu0 0.0
    %152 = vmatpush1.msra.mxu0 0.0
    %153 = vmatprep.subr.mxu0 0.0
    %154 = vmatpush1.msra.mxu0 0.0
    %155 = vmatprep.subr.mxu0 0.0
    %156 = vmatpush1.msra.mxu0 0.0
    %157 = vmatprep.subr.mxu0 0.0
    %158 = vmatpush1.msra.mxu0 0.0
    %159 = vmatprep.subr.mxu0 0.0
    %160 = vmatpush1.msra.mxu0 0.0
    %161 = vmatprep.subr.mxu0 0.0
    %162 = vmatpush1.msra.mxu0 0.0
    %163 = vmatprep.subr.mxu0 0.0
    %164 = vmatpush1.msra.mxu0 0.0
    %165 = vmatprep.subr.mxu0 0.0
    %166 = vmatpush1.msra.mxu0 0.0
    %167 = vmatprep.subr.mxu0 0.0
    %168 = vmatpush1.msra.mxu0 0.0
    %169 = vmatprep.subr.mxu0 0.0
    %170 = vmatpush1.msra.mxu0 0.0
    %171 = vmatprep.subr.mxu0 0.0
    %172 = vmatpush1.msra.mxu0 0.0
    %173 = vmatprep.mubr.f32.mxu0 0.0
    %174 = vmatmul.mubr.f32.gmra.mrb[0].mxu0 %v86
    %v175 = vpop.f32.mrb[0].mxu0
    %v176 = vadd.f32 %v47, %v175
    %v177 = vpop.f32.mrb[0].mxu0
    %178 = vmatprep.mubr.f32.mxu0 0.0
    %179 = vmatmul.mubr.f32.gmra.mrb[0].mxu0 %v89
    %v180 = vpop.f32.mrb[0].mxu0
    %v181 = vadd.f32 %v52, %v180
    %v182 = vpop.f32.mrb[0].mxu0
    %183 = vmatprep.mubr.f32.mxu0 0.0
    %184 = vmatmul.mubr.f32.gmra.mrb[0].mxu0 %v92
    %v185 = vpop.f32.mrb[0].mxu0
    %v186 = vadd.f32 %v57, %v185
    %v187 = vpop.f32.mrb[0].mxu0
    %188 = vmatprep.mubr.f32.mxu0 0.0
    %189 = vmatmul.mubr.f32.gmra.mrb[0].mxu0 %v95
    %v190 = vpop.f32.mrb[0].mxu0
    %v191 = vadd.f32 %v62, %v190
    %v192 = vpop.f32.mrb[0].mxu0
    %193 = vmatprep.mubr.f32.mxu0 0.0
    %194 = vmatmul.mubr.f32.gmra.mrb[0].mxu0 %v98
    %v195 = vpop.f32.mrb[0].mxu0
    %v196 = vadd.f32 %v67, %v195
    %v197 = vpop.f32.mrb[0].mxu0
    %198 = vmatprep.mubr.f32.mxu0 0.0
    %199 = vmatmul.mubr.f32.gmra.mrb[0].mxu0 %v101
    %v200 = vpop.f32.mrb[0].mxu0
    %v201 = vadd.f32 %v72, %v200
    %v202 = vpop.f32.mrb[0].mxu0
    %203 = vmatprep.mubr.f32.mxu0 0.0
    %204 = vmatmul.mubr.f32.gmra.mrb[0].mxu0 %v104
    %v205 = vpop.f32.mrb[0].mxu0
    %v206 = vadd.f32 %v77, %v205
    %v207 = vpop.f32.mrb[0].mxu0
    %208 = vmatprep.mubr.f32.mxu0 0.0
    %209 = vmatmul.mubr.f32.gmra.mrb[0].mxu0 %v107
    %v210 = vpop.f32.mrb[0].mxu0
    %v211 = vadd.f32 %v82, %v210
    %v212 = vpop.f32.mrb[0].mxu0
    %213 = vdwg.mxu0
    %v214 = vmax.f32 %v176, 0.0
    %v215 = vmax.f32 %v181, 0.0
    %v216 = vmax.f32 %v186, 0.0
    %v217 = vmax.f32 %v191, 0.0
    %v218 = vmax.f32 %v196, 0.0
    %v219 = vmax.f32 %v201, 0.0
    %v220 = vmax.f32 %v206, 0.0
    %v221 = vmax.f32 %v211, 0.0
    %v222 = vld [vmem:[%s3] sm:$0xff]
    %v223 = vld [vmem:[%s3 + $0x8] sm:$0xff]
    %v224 = vld [vmem:[%s3 + $0x10] sm:$0xff]
    %v225 = vld [vmem:[%s3 + $0x18] sm:$0xff]
    %v226 = vld [vmem:[%s4] sm:$0xff]
    %v227 = vld [vmem:[%s4 + $0x8] sm:$0xff]
    %v228 = vld [vmem:[%s4 + $0x10] sm:$0xff]
    %v229 = vld [vmem:[%s4 + $0x18] sm:$0xff]
    %231 = vset.pattern.permute.xlu0 0
    %232 = vperm.xlu0 %231, %v226
    %v233 = vpop.permute.xlu0 %232
    %236 = vset.pattern.permute.xlu0 0
    %237 = vperm.xlu0 %236, %v227
    %v238 = vpop.permute.xlu0 %237
    %241 = vset.pattern.permute.xlu0 0
    %242 = vperm.xlu0 %241, %v228
    %v243 = vpop.permute.xlu0 %242
    %246 = vset.pattern.permute.xlu0 0
    %247 = vperm.xlu0 %246, %v229
    %v248 = vpop.permute.xlu0 %247
    %vm250 = vcmask 523264
    %v252 = vsel %vm250, %v222, 0
    %v255 = vsel %vm250, %v223, 0
    %v258 = vsel %vm250, %v224, 0
    %v261 = vsel %vm250, %v225, 0
    %263 = vmatprep.subr.mxu0 0.0
    %264 = vmatpush1.msra.mxu0 %v214
    %265 = vmatprep.subr.mxu0 0.0
    %266 = vmatpush1.msra.mxu0 %v215
    %267 = vmatprep.subr.mxu0 0.0
    %268 = vmatpush1.msra.mxu0 %v216
    %269 = vmatprep.subr.mxu0 0.0
    %270 = vmatpush1.msra.mxu0 %v217
    %271 = vmatprep.subr.mxu0 0.0
    %272 = vmatpush1.msra.mxu0 %v218
    %273 = vmatprep.subr.mxu0 0.0
    %274 = vmatpush1.msra.mxu0 %v219
    %275 = vmatprep.subr.mxu0 0.0
    %276 = vmatpush1.msra.mxu0 %v220
    %277 = vmatprep.subr.mxu0 0.0
    %278 = vmatpush1.msra.mxu0 %v221
    %279 = vmatprep.subr.mxu0 0.0
    %280 = vmatpush1.msra.mxu0 0.0
    %281 = vmatprep.subr.mxu0 0.0
    %282 = vmatpush1.msra.mxu0 0.0
    %283 = vmatprep.subr.mxu0 0.0
    %284 = vmatpush1.msra.mxu0 0.0
    %285 = vmatprep.subr.mxu0 0.0
    %286 = vmatpush1.msra.mxu0 0.0
    %287 = vmatprep.subr.mxu0 0.0
    %288 = vmatpush1.msra.mxu0 0.0
    %289 = vmatprep.subr.mxu0 0.0
    %290 = vmatpush1.msra.mxu0 0.0
    %291 = vmatprep.subr.mxu0 0.0
    %292 = vmatpush1.msra.mxu0 0.0
    %293 = vmatprep.subr.mxu0 0.0
    %294 = vmatpush1.msra.mxu0 0.0
    %295 = vmatprep.subr.mxu0 0.0
    %296 = vmatpush1.msra.mxu0 0.0
    %297 = vmatprep.subr.mxu0 0.0
    %298 = vmatpush1.msra.mxu0 0.0
    %299 = vmatprep.subr.mxu0 0.0
    %300 = vmatpush1.msra.mxu0 0.0
    %301 = vmatprep.subr.mxu0 0.0
    %302 = vmatpush1.msra.mxu0 0.0
    %303 = vmatprep.subr.mxu0 0.0
    %304 = vmatpush1.msra.mxu0 0.0
    %305 = vmatprep.subr.mxu0 0.0
    %306 = vmatpush1.msra.mxu0 0.0
    %307 = vmatprep.subr.mxu0 0.0
    %308 = vmatpush1.msra.mxu0 0.0
    %309 = vmatprep.subr.mxu0 0.0
    %310 = vmatpush1.msra.mxu0 0.0
    %311 = vmatprep.subr.mxu0 0.0
    %312 = vmatpush1.msra.mxu0 0.0
    %313 = vmatprep.subr.mxu0 0.0
    %314 = vmatpush1.msra.mxu0 0.0
    %315 = vmatprep.subr.mxu0 0.0
    %316 = vmatpush1.msra.mxu0 0.0
    %317 = vmatprep.subr.mxu0 0.0
    %318 = vmatpush1.msra.mxu0 0.0
    %319 = vmatprep.subr.mxu0 0.0
    %320 = vmatpush1.msra.mxu0 0.0
    %321 = vmatprep.subr.mxu0 0.0
    %322 = vmatpush1.msra.mxu0 0.0
    %323 = vmatprep.subr.mxu0 0.0
    %324 = vmatpush1.msra.mxu0 0.0
    %325 = vmatprep.subr.mxu0 0.0
    %326 = vmatpush1.msra.mxu0 0.0
    %327 = vmatprep.mubr.f32.mxu0 0.0
    %328 = vmatmul.mubr.f32.gmra.mrb[0].mxu0 %v252
    %v329 = vpop.f32.mrb[0].mxu0
    %v330 = vadd.f32 %v233, %v329
    %v331 = vpop.f32.mrb[0].mxu0
    %332 = vmatprep.mubr.f32.mxu0 0.0
    %333 = vmatmul.mubr.f32.gmra.mrb[0].mxu0 %v255
    %v334 = vpop.f32.mrb[0].mxu0
    %v335 = vadd.f32 %v238, %v334
    %v336 = vpop.f32.mrb[0].mxu0
    %337 = vmatprep.mubr.f32.mxu0 0.0
    %338 = vmatmul.mubr.f32.gmra.mrb[0].mxu0 %v258
    %v339 = vpop.f32.mrb[0].mxu0
    %v340 = vadd.f32 %v243, %v339
    %v341 = vpop.f32.mrb[0].mxu0
    %342 = vmatprep.mubr.f32.mxu0 0.0
    %343 = vmatmul.mubr.f32.gmra.mrb[0].mxu0 %v261
    %v344 = vpop.f32.mrb[0].mxu0
    %v345 = vadd.f32 %v248, %v344
    %v346 = vpop.f32.mrb[0].mxu0
    %347 = vdwg.mxu0
    %v348 = vmax.f32 %v330, 0.0
    %v349 = vmax.f32 %v335, 0.0
    %v350 = vmax.f32 %v340, 0.0
    %v351 = vmax.f32 %v345, 0.0
    %v352 = vld [vmem:[%s5] sm:$0xf]
    %v353 = vld [vmem:[%s6] sm:$0xf]
    %355 = vset.pattern.permute.xlu0 0
    %356 = vperm.xlu0 %355, %v353
    %v357 = vpop.permute.xlu0 %356
    %vm359 = vcmask 261120
    %v361 = vsel %vm359, %v352, 0
    %363 = vmatprep.subr.mxu0 0.0
    %364 = vmatpush1.msra.mxu0 %v348
    %365 = vmatprep.subr.mxu0 0.0
    %366 = vmatpush1.msra.mxu0 %v349
    %367 = vmatprep.subr.mxu0 0.0
    %368 = vmatpush1.msra.mxu0 %v350
    %369 = vmatprep.subr.mxu0 0.0
    %370 = vmatpush1.msra.mxu0 %v351
    %371 = vmatprep.subr.mxu0 0.0
    %372 = vmatpush1.msra.mxu0 0.0
    %373 = vmatprep.subr.mxu0 0.0
    %374 = vmatpush1.msra.mxu0 0.0
    %375 = vmatprep.subr.mxu0 0.0
    %376 = vmatpush1.msra.mxu0 0.0
    %377 = vmatprep.subr.mxu0 0.0
    %378 = vmatpush1.msra.mxu0 0.0
    %379 = vmatprep.subr.mxu0 0.0
    %380 = vmatpush1.msra.mxu0 0.0
    %381 = vmatprep.subr.mxu0 0.0
    %382 = vmatpush1.msra.mxu0 0.0
    %383 = vmatprep.subr.mxu0 0.0
    %384 = vmatpush1.msra.mxu0 0.0
    %385 = vmatprep.subr.mxu0 0.0
    %386 = vmatpush1.msra.mxu0 0.0
    %387 = vmatprep.subr.mxu0 0.0
    %388 = vmatpush1.msra.mxu0 0.0
    %389 = vmatprep.subr.mxu0 0.0
    %390 = vmatpush1.msra.mxu0 0.0
    %391 = vmatprep.subr.mxu0 0.0
    %392 = vmatpush1.msra.mxu0 0.0
    %393 = vmatprep.subr.mxu0 0.0
    %394 = vmatpush1.msra.mxu0 0.0
    %395 = vmatprep.subr.mxu0 0.0
    %396 = vmatpush1.msra.mxu0 0.0
    %397 = vmatprep.subr.mxu0 0.0
    %398 = vmatpush1.msra.mxu0 0.0
    %399 = vmatprep.subr.mxu0 0.0
    %400 = vmatpush1.msra.mxu0 0.0
    %401 = vmatprep.subr.mxu0 0.0
    %402 = vmatpush1.msra.mxu0 0.0
    %403 = vmatprep.subr.mxu0 0.0
    %404 = vmatpush1.msra.mxu0 0.0
    %405 = vmatprep.subr.mxu0 0.0
    %406 = vmatpush1.msra.mxu0 0.0
    %407 = vmatprep.subr.mxu0 0.0
    %408 = vmatpush1.msra.mxu0 0.0
    %409 = vmatprep.subr.mxu0 0.0
    %410 = vmatpush1.msra.mxu0 0.0
    %411 = vmatprep.subr.mxu0 0.0
    %412 = vmatpush1.msra.mxu0 0.0
    %413 = vmatprep.subr.mxu0 0.0
    %414 = vmatpush1.msra.mxu0 0.0
    %415 = vmatprep.subr.mxu0 0.0
    %416 = vmatpush1.msra.mxu0 0.0
    %417 = vmatprep.subr.mxu0 0.0
    %418 = vmatpush1.msra.mxu0 0.0
    %419 = vmatprep.subr.mxu0 0.0
    %420 = vmatpush1.msra.mxu0 0.0
    %421 = vmatprep.subr.mxu0 0.0
    %422 = vmatpush1.msra.mxu0 0.0
    %423 = vmatprep.subr.mxu0 0.0
    %424 = vmatpush1.msra.mxu0 0.0
    %425 = vmatprep.subr.mxu0 0.0
    %426 = vmatpush1.msra.mxu0 0.0
    %427 = vmatprep.mubr.f32.mxu0 0.0
    %428 = vmatmul.mubr.f32.gmra.mrb[0].mxu0 %v361
    %v429 = vpop.f32.mrb[0].mxu0
    %v430 = vadd.f32 %v357, %v429
    %v431 = vpop.f32.mrb[0].mxu0
    %432 = vdwg.mxu0
    %v433 = vxor.u32 %v430, 2147483648
    %v434 = vmul.f32 %v433, 1.442695
    %v435 = vpow.pop %v434
    %v436 = vadd.f32 %v435, 1.0
    %v437 = vrcp.pop %v436
    %v438 = vmul.f32 1.0, %v437
    %v439 = vmul.f32 %v438, 2.0
    %440 = vst [vmem:[#allocation2] sm:$0xf] %v439
    // Predicated region
    $region30: #{tpu_custom_call.1} parent=1 // pred_check
      _
    $region31: #{tpu_custom_call.1} parent=1 // pred_check_branch
      %442 = sbr.rel (0) target = $region33
    $region32: #{tpu_custom_call.1} parent=1 // pred_region
      %s444 = ssub.s32 64, 64
      %445 = vsyncadd [#allocation3], %s444
      %s447 = sshll.u32 [#allocation2], 4
      %s448 = int_to_ptr.vmem [resolvable:$true] %s447
      %450 = dma.vmem_to_hbm [thread:$0]  %s448, 64, %s7, [#allocation3]
    $region33: #{tpu_custom_call.1} parent=1 // pred_fallthru
      _
    // Predicated region
    $region34: #{tpu_custom_call.1} parent=1 // pred_check
      _
    $region35: #{tpu_custom_call.1} parent=1 // pred_check_branch
      %452 = sbr.rel (0) target = $region37
    $region36: #{tpu_custom_call.1} parent=1 // pred_region
      %453 = dma.done [#allocation3], 64
    $region37: #{tpu_custom_call.1} parent=1 // pred_fallthru
      _
    %454 = vsyncpa [#allocation3], 1

</llo_original>
